<compile_context>
chip_gen: v6e
topology: v6e:2x2x1
jax: 0.10.0
libtpu: 0.0.40
codegen_flags: <defaults>
</compile_context>

<pallas_src>
import jax
import jax.numpy as jnp
import numpy as np
from jax.experimental import pallas as pl
from jax.experimental.pallas import tpu as pltpu


def _series_decomp_kernel(x_ref, m_ref, res_ref, mm_ref):
    x = x_ref[...]                                                     # (TR, L)
    mm = jnp.dot(x, m_ref[...], preferred_element_type=jnp.float32)   # moving mean
    mm_ref[...] = mm.astype(mm_ref.dtype)
    res_ref[...] = (x - mm).astype(res_ref.dtype)


def _build_avg_matrix(seq_len, kernel_size):
    """Banded (L, L) matrix so that (row @ M)[i] == replicate-padded moving average."""
    pad = (kernel_size - 1) // 2
    out_idx = np.arange(seq_len)
    m = np.zeros((seq_len, seq_len), dtype=np.float32)
    for j in range(kernel_size):
        src = np.clip(out_idx - pad + j, 0, seq_len - 1)
        np.add.at(m, (src, out_idx), 1.0 / kernel_size)               # accumulate clamped edges
    return jnp.asarray(m)


def series_decomp(x, kernel_size, *, row_tile=256):
    """x: [B, C, L] float32. Returns (res, moving_mean), each [B, C, L]."""
    if kernel_size % 2 != 1:
        # TODO(synk): even kernel_size makes the PyTorch module's `x - moving_mean`
        # shape-mismatch (pooled length L-1); only odd kernel sizes are meaningful.
        raise ValueError("series_decomp requires an odd kernel_size")
    B, C, L = x.shape
    R = B * C
    x2d = x.reshape(R, L)
    m = _build_avg_matrix(L, kernel_size).astype(x.dtype)

    # Row tile: full R when small (block == full dim), otherwise a multiple of 8.
    tr = min(row_tile, R)
    grid = (pl.cdiv(R, tr),)

    res2d, mm2d = pl.pallas_call(
        _series_decomp_kernel,
        grid=grid,
        in_specs=[
            pl.BlockSpec((tr, L), lambda r: (r, 0)),    # series rows (sublane-dense)
            pl.BlockSpec((L, L), lambda r: (0, 0)),     # averaging matrix (constant index -> resident)
        ],
        out_specs=(
            pl.BlockSpec((tr, L), lambda r: (r, 0)),
            pl.BlockSpec((tr, L), lambda r: (r, 0)),
        ),
        out_shape=(
            jax.ShapeDtypeStruct((R, L), x.dtype),      # res
            jax.ShapeDtypeStruct((R, L), x.dtype),      # moving_mean
        ),
        compiler_params=pltpu.CompilerParams(dimension_semantics=("parallel",)),
    )(x2d, m)

    return res2d.reshape(B, C, L), mm2d.reshape(B, C, L)


def series_decomp_reference(x, kernel_size):
    """Pure-JAX mirror of the PyTorch module."""
    pad = (kernel_size - 1) // 2
    L = x.shape[-1]
    front = jnp.repeat(x[:, :, :1], pad, axis=-1)
    end = jnp.repeat(x[:, :, -1:], pad, axis=-1)
    xp = jnp.concatenate([front, x, end], axis=-1)
    windows = jnp.stack([xp[:, :, j:j + L] for j in range(kernel_size)], axis=0)
    mm = jnp.mean(windows, axis=0)
    return x - mm, mm


if __name__ == "__main__":
    key = jax.random.PRNGKey(0)
    k1, k2 = jax.random.split(key)

    # Primary small config: x = [B, C, L] = [2, 4, 16], kernel_size = 5.
    B, C, L, ks = 2, 4, 16, 5
    x = jax.random.normal(k1, (B, C, L), jnp.float32)
    res, mm = series_decomp(x, ks)
    res = jax.block_until_ready(res)
    mm = jax.block_until_ready(mm)
    ref_res, ref_mm = series_decomp_reference(x, ks)
    assert res.shape == (B, C, L) and mm.shape == (B, C, L)
    np.testing.assert_allclose(np.asarray(mm), np.asarray(ref_mm), atol=1e-5, rtol=1e-5)
    np.testing.assert_allclose(np.asarray(res), np.asarray(ref_res), atol=1e-5, rtol=1e-5)

    # Second config exercising row tiling + masked boundary block (R = 15 rows, tile = 8).
    B2, C2, L2, ks2 = 3, 5, 24, 7
    x2 = jax.random.normal(k2, (B2, C2, L2), jnp.float32)
    res2, mm2 = series_decomp(x2, ks2, row_tile=8)
    res2 = jax.block_until_ready(res2)
    mm2 = jax.block_until_ready(mm2)
    ref_res2, ref_mm2 = series_decomp_reference(x2, ks2)
    np.testing.assert_allclose(np.asarray(mm2), np.asarray(ref_mm2), atol=1e-5, rtol=1e-5)
    np.testing.assert_allclose(np.asarray(res2), np.asarray(ref_res2), atol=1e-5, rtol=1e-5)

    print("KERNEL_OK")
</pallas_src>

<mosaic_0001>
module attributes {stable_mosaic.version = 11 : i64} {
  func.func @_series_decomp_kernel(%arg0: i32, %arg1: memref<8x16xf32, #tpu.memory_space<vmem>>, %arg2: memref<16x16xf32, #tpu.memory_space<vmem>>, %arg3: memref<8x16xf32, #tpu.memory_space<vmem>>, %arg4: memref<8x16xf32, #tpu.memory_space<vmem>>) attributes {dimension_semantics = [#tpu.dimension_semantics<parallel>], iteration_bounds = array<i64: 1>, scalar_prefetch = 0 : i64, scratch_operands = 0 : i64, tpu.core_type = #tpu.core_type<tc>, window_params = [{transform_indices = @transform_0, window_bounds = array<i64: 8, 16>}, {pipeline_mode = #tpu.pipeline_mode<synchronous>, transform_indices = @transform_1, window_bounds = array<i64: 16, 16>}, {transform_indices = @transform_2, window_bounds = array<i64: 8, 16>}, {transform_indices = @transform_3, window_bounds = array<i64: 8, 16>}]} {
    %c0 = arith.constant 0 : index
    %c0_0 = arith.constant 0 : index
    %0 = vector.load %arg1[%c0, %c0_0] : memref<8x16xf32, #tpu.memory_space<vmem>>, vector<8x16xf32>
    %c0_1 = arith.constant 0 : index
    %c0_2 = arith.constant 0 : index
    %1 = vector.load %arg2[%c0_1, %c0_2] : memref<16x16xf32, #tpu.memory_space<vmem>>, vector<16x16xf32>
    %cst = arith.constant dense<0.000000e+00> : vector<8x16xf32>
    %2 = tpu.matmul %0, %1, %cst {dimension_numbers = #tpu.dot_dimension_numbers<[1], [0], [0], [1], [0, 0, 1, 1], [], []>} : vector<8x16xf32>, vector<16x16xf32>, vector<8x16xf32> -> vector<8x16xf32>
    %c0_3 = arith.constant 0 : index
    %c0_4 = arith.constant 0 : index
    %3 = vector.load %arg4[%c0_3, %c0_4] : memref<8x16xf32, #tpu.memory_space<vmem>>, vector<8x16xf32>
    tpu.vector_store %arg4[%c0_3, %c0_4], %2 {strides = array<i32>} : memref<8x16xf32, #tpu.memory_space<vmem>>, vector<8x16xf32>,
    %4 = arith.subf %0, %2 : vector<8x16xf32>
    %c0_5 = arith.constant 0 : index
    %c0_6 = arith.constant 0 : index
    %5 = vector.load %arg3[%c0_5, %c0_6] : memref<8x16xf32, #tpu.memory_space<vmem>>, vector<8x16xf32>
    tpu.vector_store %arg3[%c0_5, %c0_6], %4 {strides = array<i32>} : memref<8x16xf32, #tpu.memory_space<vmem>>, vector<8x16xf32>,
    return
  }
  func.func @transform_0(%arg0: i32) -> (i32, i32) {
    %c0_i32 = arith.constant 0 : i32
    %c0_i32_0 = arith.constant 0 : i32
    return %arg0, %c0_i32 : i32, i32
  }
  func.func @transform_1(%arg0: i32) -> (i32, i32) {
    %c0_i32 = arith.constant 0 : i32
    %c0_i32_0 = arith.constant 0 : i32
    %c0_i32_1 = arith.constant 0 : i32
    return %c0_i32, %c0_i32_0 : i32, i32
  }
  func.func @transform_2(%arg0: i32) -> (i32, i32) {
    %c0_i32 = arith.constant 0 : i32
    %c0_i32_0 = arith.constant 0 : i32
    return %arg0, %c0_i32 : i32, i32
  }
  func.func @transform_3(%arg0: i32) -> (i32, i32) {
    %c0_i32 = arith.constant 0 : i32
    %c0_i32_0 = arith.constant 0 : i32
    return %arg0, %c0_i32 : i32, i32
  }
}

</mosaic_0001>

<llo_original>
// kernel: tpu_custom_call.1
$region0: #{tpu_custom_call.1}
  #allocation0 [shape = 'u32[]', space=smem, size = 0x4, offset = 0x4, fixed_abs, tag = 'smem constant byte address 0x4 - core index']
  #allocation1 [shape = 'u32[144,128]{1,0:T(1,128)}', space=vmem, size = 0x12000, scoped, tag = 'internal scratch']
  %s0 = inlined_call_operand.hbm [shape: f32[8,16], index: 0, kind: input, shape index: {}]
  %s1 = inlined_call_operand.hbm [shape: f32[16,16], index: 1, kind: input, shape index: {}]
  %s2 = inlined_call_operand.hbm [shape: f32[8,16], index: 2, kind: output, shape index: {0}]
  %s3 = inlined_call_operand.hbm [shape: f32[8,16], index: 3, kind: output, shape index: {1}]
  %4 = xla_tuple %s2, %s3
  %s5 = sld [smem:[#allocation0]]
  $region34: #{tpu_custom_call.1} parent=0
    _
  %s7 = ssub.s32 1, %s5
  %s8 = scalar_select 0, %s7, %s5
  $region1: #{tpu_custom_call.1} parent=0
    #allocation2 [shape = 'u8[4096]{0}', space=vmem, size = 0x1000, scoped, tag = 'input window, operand 0, single buffered']
    #allocation3 [shape = 's32[1]{0}', space=sflag, size = 0x4, scoped, tag = 'scoped memory for tpu_custom_call.1']
    #allocation4 [shape = 's32[1]{0}', space=sflag, size = 0x4, scoped, tag = 'scoped memory for tpu_custom_call.1']
    #allocation5 [shape = 'u8[8192]{0}', space=vmem, size = 0x2000, scoped, tag = 'input window, operand 1, single buffered']
    #allocation6 [shape = 's32[1]{0}', space=sflag, size = 0x4, scoped, tag = 'scoped memory for tpu_custom_call.1']
    #allocation7 [shape = 'u8[4096]{0}', space=vmem, size = 0x1000, scoped, tag = 'output window, operand 0, single buffered']
    #allocation8 [shape = 'u8[4096]{0}', space=vmem, size = 0x1000, scoped, tag = 'output window, operand 1, single buffered']
    #allocation9 [shape = 's32[1]{0}', space=sflag, size = 0x4, scoped, tag = 'scoped memory for tpu_custom_call.1']
    %9 = vsyncpa [#allocation3], 0
    %10 = vsyncpa [#allocation6], 0
    %11 = vsyncpa [#allocation4], 0
    %12 = vsyncpa [#allocation9], 0
    // Predicated region
    $region2: #{tpu_custom_call.1} parent=1 // pred_check
      _
    $region3: #{tpu_custom_call.1} parent=1 // pred_check_branch
      %14 = sbr.rel (0) target = $region5
    $region4: #{tpu_custom_call.1} parent=1 // pred_region
      %s16 = ssub.s32 128, 128
      %17 = vsyncadd [#allocation3], %s16
      %s19 = sshll.u32 [#allocation2], 4
      %s20 = int_to_ptr.vmem [resolvable:$true] %s19
      %22 = dma.hbm_to_vmem [thread:$0]  %s0, 128, %s20, [#allocation3]
    $region5: #{tpu_custom_call.1} parent=1 // pred_fallthru
      _
    // Predicated region
    $region6: #{tpu_custom_call.1} parent=1 // pred_check
      _
    $region7: #{tpu_custom_call.1} parent=1 // pred_check_branch
      %24 = sbr.rel (0) target = $region9
    $region8: #{tpu_custom_call.1} parent=1 // pred_region
      %s26 = ssub.s32 256, 256
      %27 = vsyncadd [#allocation6], %s26
      %s28 = sshll.u32 [#allocation5], 4
      %s29 = int_to_ptr.vmem [resolvable:$true] %s28
      %34 = dma.hbm_to_vmem [thread:$0]  %s1, 256, %s29, [#allocation6], 128, 128, 8
    $region9: #{tpu_custom_call.1} parent=1 // pred_fallthru
      _
    // Predicated region
    $region10: #{tpu_custom_call.1} parent=1 // pred_check
      _
    $region11: #{tpu_custom_call.1} parent=1 // pred_check_branch
      %36 = sbr.rel (0) target = $region13
    $region12: #{tpu_custom_call.1} parent=1 // pred_region
      %37 = dma.done [#allocation3], 128
    $region13: #{tpu_custom_call.1} parent=1 // pred_fallthru
      _
    // Predicated region
    $region14: #{tpu_custom_call.1} parent=1 // pred_check
      _
    $region15: #{tpu_custom_call.1} parent=1 // pred_check_branch
      %39 = sbr.rel (0) target = $region17
    $region16: #{tpu_custom_call.1} parent=1 // pred_region
      %40 = dma.done [#allocation6], 256
    $region17: #{tpu_custom_call.1} parent=1 // pred_fallthru
      _
    %v41 = vld [vmem:[#allocation2] sm:$0xff]
    %v42 = vld [vmem:[#allocation5] sm:$0xff]
    %v43 = vld [vmem:[#allocation5 + $0x8] sm:$0xff]
    %vm44 = vcmask 130048
    %v46 = vsel %vm44, %v41, 0
    %48 = vmatprep.subr.mxu0 0.0
    %49 = vmatpush1.msra.mxu0 0.0
    %50 = vmatprep.subr.mxu0 0.0
    %51 = vmatpush1.msra.mxu0 0.0
    %52 = vmatprep.subr.mxu0 0.0
    %53 = vmatpush1.msra.mxu0 0.0
    %54 = vmatprep.subr.mxu0 0.0
    %55 = vmatpush1.msra.mxu0 0.0
    %56 = vmatprep.subr.mxu0 0.0
    %57 = vmatpush1.msra.mxu0 0.0
    %58 = vmatprep.subr.mxu0 0.0
    %59 = vmatpush1.msra.mxu0 0.0
    %60 = vmatprep.subr.mxu0 0.0
    %61 = vmatpush1.msra.mxu0 0.0
    %62 = vmatprep.subr.mxu0 0.0
    %63 = vmatpush1.msra.mxu0 0.0
    %64 = vmatprep.subr.mxu0 0.0
    %65 = vmatpush1.msra.mxu0 0.0
    %66 = vmatprep.subr.mxu0 0.0
    %67 = vmatpush1.msra.mxu0 0.0
    %68 = vmatprep.subr.mxu0 0.0
    %69 = vmatpush1.msra.mxu0 0.0
    %70 = vmatprep.subr.mxu0 0.0
    %71 = vmatpush1.msra.mxu0 0.0
    %72 = vmatprep.subr.mxu0 0.0
    %73 = vmatpush1.msra.mxu0 0.0
    %74 = vmatprep.subr.mxu0 0.0
    %75 = vmatpush1.msra.mxu0 0.0
    %76 = vmatprep.subr.mxu0 0.0
    %77 = vmatpush1.msra.mxu0 %v43
    %78 = vmatprep.subr.mxu0 0.0
    %79 = vmatpush1.msra.mxu0 %v42
    %80 = vmatprep.subr.mxu0 0.0
    %81 = vmatpush2.msra.mxu0 0.0
    %82 = vmatprep.subr.mxu0 0.0
    %83 = vmatpush2.msra.mxu0 0.0
    %84 = vmatprep.subr.mxu0 0.0
    %85 = vmatpush2.msra.mxu0 0.0
    %86 = vmatprep.subr.mxu0 0.0
    %87 = vmatpush2.msra.mxu0 0.0
    %88 = vmatprep.subr.mxu0 0.0
    %89 = vmatpush2.msra.mxu0 0.0
    %90 = vmatprep.subr.mxu0 0.0
    %91 = vmatpush2.msra.mxu0 0.0
    %92 = vmatprep.subr.mxu0 0.0
    %93 = vmatpush2.msra.mxu0 0.0
    %94 = vmatprep.subr.mxu0 0.0
    %95 = vmatpush2.msra.mxu0 0.0
    %96 = vmatprep.subr.mxu0 0.0
    %97 = vmatpush2.msra.mxu0 0.0
    %98 = vmatprep.subr.mxu0 0.0
    %99 = vmatpush2.msra.mxu0 0.0
    %100 = vmatprep.subr.mxu0 0.0
    %101 = vmatpush2.msra.mxu0 0.0
    %102 = vmatprep.subr.mxu0 0.0
    %103 = vmatpush2.msra.mxu0 0.0
    %104 = vmatprep.subr.mxu0 0.0
    %105 = vmatpush2.msra.mxu0 0.0
    %106 = vmatprep.subr.mxu0 0.0
    %107 = vmatpush2.msra.mxu0 0.0
    %108 = vmatprep.subr.mxu0 0.0
    %109 = vmatpush2.msra.mxu0 0.0
    %110 = vmatprep.subr.mxu0 0.0
    %111 = vmatpush2.msra.mxu0 0.0
    %112 = vmatprep.mubr.f32.mxu0 0.0
    %113 = vmatmul.mubr.f32.gmra.mxu0 %v46
    %v114 = vpop.f32.mrf.mxu0
    %v115 = vadd.f32 0.0, %v114
    %v116 = vpop.f32.mrf.mxu0
    %117 = vdwg.mxu0
    %118 = vst.msk [vmem:[#allocation8] sm:$0xff] %vm44, %v115
    %v119 = vsub.f32 %v41, %v115
    %120 = vst.msk [vmem:[#allocation7] sm:$0xff] %vm44, %v119
    // Predicated region
    $region18: #{tpu_custom_call.1} parent=1 // pred_check
      _
    $region19: #{tpu_custom_call.1} parent=1 // pred_check_branch
      %122 = sbr.rel (0) target = $region21
    $region20: #{tpu_custom_call.1} parent=1 // pred_region
      %s124 = ssub.s32 128, 128
      %125 = vsyncadd [#allocation4], %s124
      %s127 = sshll.u32 [#allocation7], 4
      %s128 = int_to_ptr.vmem [resolvable:$true] %s127
      %130 = dma.vmem_to_hbm [thread:$0]  %s128, 128, %s2, [#allocation4]
    $region21: #{tpu_custom_call.1} parent=1 // pred_fallthru
      _
    // Predicated region
    $region22: #{tpu_custom_call.1} parent=1 // pred_check
      _
    $region23: #{tpu_custom_call.1} parent=1 // pred_check_branch
      %132 = sbr.rel (0) target = $region25
    $region24: #{tpu_custom_call.1} parent=1 // pred_region
      %s134 = ssub.s32 128, 128
      %135 = vsyncadd [#allocation9], %s134
      %s137 = sshll.u32 [#allocation8], 4
      %s138 = int_to_ptr.vmem [resolvable:$true] %s137
      %140 = dma.vmem_to_hbm [thread:$0]  %s138, 128, %s3, [#allocation9]
    $region25: #{tpu_custom_call.1} parent=1 // pred_fallthru
      _
    // Predicated region
    $region26: #{tpu_custom_call.1} parent=1 // pred_check
      _
    $region27: #{tpu_custom_call.1} parent=1 // pred_check_branch
      %142 = sbr.rel (0) target = $region29
    $region28: #{tpu_custom_call.1} parent=1 // pred_region
      %143 = dma.done [#allocation4], 128
    $region29: #{tpu_custom_call.1} parent=1 // pred_fallthru
      _
    // Predicated region
    $region30: #{tpu_custom_call.1} parent=1 // pred_check
      _
    $region31: #{tpu_custom_call.1} parent=1 // pred_check_branch
      %145 = sbr.rel (0) target = $region33
    $region32: #{tpu_custom_call.1} parent=1 // pred_region
      %146 = dma.done [#allocation9], 128
    $region33: #{tpu_custom_call.1} parent=1 // pred_fallthru
      _
    %147 = vsyncpa [#allocation3], 1
    %148 = vsyncpa [#allocation6], 1
    %149 = vsyncpa [#allocation4], 1
    %150 = vsyncpa [#allocation9], 1

</llo_original>
